<compile_context>
chip_gen: v5e
topology: v5e:2x2
jax: 0.10.0
libtpu: 0.0.40
codegen_flags: <defaults>
</compile_context>

<pallas_src>
import jax
import jax.numpy as jnp
from jax.experimental import pallas as pl
from jax.experimental.pallas import tpu as pltpu


# ---------------------------------------------------------------------------
# compute_shift: tiny per-row/scalar statistics on the classifier weight.
# Done in the JAX wrapper (O(OC*C) on a tiny tensor, not worth a kernel).
# ---------------------------------------------------------------------------
def compute_shift(shift, weight):
    if isinstance(shift, float):
        return shift
    shift_type = list(shift.keys())[0]
    if shift_type == 'global_min':
        return jnp.abs(jnp.min(weight)) + float(shift[shift_type])
    elif shift_type == 'adaptive_min':
        return jnp.abs(jnp.min(weight, axis=1, keepdims=True)) + float(shift[shift_type])
    elif shift_type == 'global_multiple':
        gmin = jnp.min(weight)
        gmax = jnp.max(weight)
        k = shift[shift_type]
        return (gmax - k * gmin) / float(k - 1)
    elif shift_type == 'adaptive_multiple':
        amin = jnp.abs(jnp.min(weight, axis=1, keepdims=True))
        # (sic) amax intentionally uses min() to match the reference implementation's bug.
        amax = jnp.abs(jnp.min(weight, axis=1, keepdims=True))
        k = shift[shift_type]
        return (amax - k * amin) / float(k - 1)
    return shift


# ---------------------------------------------------------------------------
# Fused kernel: one grid step = (batch element b, spatial tile s).
#   w_ref:     (OC, C)     effective weight, PRE-scaled by 1/(H*W), in the x dtype,
#                          staged once into VMEM (single buffer, not pipelined)
#   x_ref:     (1, C, tS)  flattened feature-map tile (lane axis = spatial), native dtype
#   pred_ref:  (1, 1, OC)  f32 per-tile partial of the spatial sum
#   score_ref: (1, OC, tS) score-map tile
# ---------------------------------------------------------------------------
def _custom_avgpool_kernel(w_ref, x_ref, pred_ref, score_ref):
    # 1x1 conv == per-pixel matmul on the MXU; native-dtype feed, f32 accumulation.
    score = jnp.dot(w_ref[...], x_ref[0], preferred_element_type=jnp.float32)  # (OC, tS)
    score_ref[0] = score.astype(score_ref.dtype)
    # Per-tile partial of pred (padded lanes are exactly zero); summed in the wrapper.
    pred_ref[...] = jnp.sum(score, axis=-1)[None, None, :]


# ---------------------------------------------------------------------------
# Generation-aware VMEM budgeting.
# ---------------------------------------------------------------------------
def _vmem_budget_bytes():
    try:
        cap = pltpu.get_tpu_info().vmem_capacity_bytes
    except Exception:
        cap = 64 * 1024 * 1024  # conservative default (v7x: 64 MiB per TensorCore)
    # ~48 MiB on v7x, ~96 MiB on v5e/v6e: large lane-dense tiles without spilling.
    return int(cap * 3 // 4)


def _choose_s_tile(S, C, OC, x_dtype, score_dtype):
    """Largest multiple-of-128 spatial tile whose full VMEM footprint (single-buffered
    weight + double-buffered x and score blocks + f32 score intermediate + pred blocks)
    fits the per-generation budget."""
    budget = _vmem_budget_bytes()
    xb = jnp.dtype(x_dtype).itemsize
    sb = jnp.dtype(score_dtype).itemsize
    fixed = OC * C * xb + 2 * OC * 4                    # weight (1 buf) + pred blocks (2 bufs)
    per_lane = 2 * C * xb + 2 * OC * sb + OC * 4        # x (2 bufs) + score (2 bufs) + f32 score
    avail = max(budget - fixed, 128 * per_lane)
    tS = max(128, (avail // per_lane) // 128 * 128)
    tS = min(tS, pl.cdiv(S, 128) * 128)                 # never larger than one padded S
    return int(tS), int(budget)


# ---------------------------------------------------------------------------
# Wrapper: mirrors CustomAvgPool2d.forward(feature_map, layer, truncate, shift, bias)
# with layer passed as (weight, bias_vec).
# ---------------------------------------------------------------------------
def custom_avgpool2d(feature_map, weight, bias_vec=None, *, truncate=False,
                     shift=0.0, bias=True, score_dtype=None):
    B, C, H, W = feature_map.shape
    S = H * W
    x_dtype = feature_map.dtype
    if score_dtype is None:
        score_dtype = x_dtype

    # Normalize the classifier weight to (OC, C).
    if weight.ndim == 4:
        # TODO(synk): general conv2d (kernel size > 1) has no 1x1-matmul equivalent here.
        assert weight.shape[2] == 1 and weight.shape[3] == 1, \
            "only 1x1 conv / Linear-style classifier weights are supported"
        w2 = weight.reshape(weight.shape[0], weight.shape[1])
    else:
        w2 = weight
    OC = w2.shape[0]
    assert w2.shape[1] == C

    # weight = layer.weight + compute_shift(...)  (truncate replaces it entirely).
    if truncate:
        w_eff = jnp.where(w2 > 0.0, w2, jnp.zeros_like(w2))
    else:
        w_eff = w2 + compute_shift(shift, w2)
    # Fold 1/(H*W) of avg_feature_map into the tiny weight here (fuses with the
    # elementwise op above) and cast to the feature map's dtype so the MXU runs at
    # its native rate (f32 accumulation comes from preferred_element_type).
    w_eff = (w_eff.astype(jnp.float32) * (1.0 / float(S))).astype(x_dtype)

    # Flatten spatial dims onto the lane axis.
    x = feature_map.reshape(B, C, S)

    # Pick the spatial tile against the per-generation VMEM budget, then pad S UP to a
    # multiple of the tile (padded lanes are zero -> pred exact; sliced off below).
    tS, vmem_limit = _choose_s_tile(S, C, OC, x_dtype, score_dtype)
    S_pad = pl.cdiv(S, tS) * tS
    if S_pad != S:
        x = jnp.pad(x, ((0, 0), (0, 0), (0, S_pad - S)))
    nS = S_pad // tS

    pred_part, score = pl.pallas_call(
        _custom_avgpool_kernel,
        out_shape=(jax.ShapeDtypeStruct((B, nS, OC), jnp.float32),
                   jax.ShapeDtypeStruct((B, OC, S_pad), score_dtype)),
        grid=(B, nS),
        in_specs=[
            # Grid-invariant weight: staged once into VMEM (single buffer, no pipeline).
            pl.BlockSpec(memory_space=pltpu.MemorySpace.VMEM),
            pl.BlockSpec((1, C, tS), lambda b, s: (b, 0, s)),
        ],
        out_specs=(
            pl.BlockSpec((1, 1, OC), lambda b, s: (b, s, 0)),
            pl.BlockSpec((1, OC, tS), lambda b, s: (b, 0, s)),
        ),
        compiler_params=pltpu.CompilerParams(
            dimension_semantics=("parallel", "parallel"),
            vmem_limit_bytes=vmem_limit),
    )(w_eff, x)

    pred = jnp.sum(pred_part, axis=1)                      # (B, OC), f32
    if bias and bias_vec is not None:
        pred = pred + bias_vec.reshape(1, -1).astype(pred.dtype)
    score_map = score[:, :, :S].reshape(B, OC, H, W)
    return pred, score_map


# ---------------------------------------------------------------------------
# Pure-JAX transcription of the PyTorch forward for validation.
# ---------------------------------------------------------------------------
def _reference(fm, weight, bias_vec, *, truncate=False, shift=0.0, bias=True):
    B, C, H, W = fm.shape
    avg = fm / (H * W)
    w2 = weight.reshape(weight.shape[0], -1) if weight.ndim == 4 else weight
    if truncate:
        w_eff = jnp.where(w2 > 0.0, w2, jnp.zeros_like(w2))
    else:
        w_eff = w2 + compute_shift(shift, w2)
    score = jnp.einsum('oc,bchw->bohw', w_eff.astype(jnp.float32),
                       avg.astype(jnp.float32))
    pred = jnp.sum(score, axis=(2, 3))
    if bias and bias_vec is not None:
        pred = pred + bias_vec.reshape(1, -1)
    return pred, score


if __name__ == "__main__":
    key = jax.random.PRNGKey(0)
    k_x, k_w, k_b = jax.random.split(key, 3)

    B, C, H, W, OC = 2, 4, 16, 16, 8
    feature_map = jax.random.normal(k_x, (B, C, H, W), dtype=jnp.float32)
    weight = jax.random.normal(k_w, (OC, C), dtype=jnp.float32) * 0.1   # nn.Linear(C, OC)-style
    bias_vec = jax.random.normal(k_b, (OC,), dtype=jnp.float32) * 0.1

    # Case 1: f32, Linear-style weight, shift=0.0, with bias.
    pred, score_map = custom_avgpool2d(feature_map, weight, bias_vec,
                                       truncate=False, shift=0.0, bias=True)
    jax.block_until_ready((pred, score_map))
    ref_pred, ref_score = _reference(feature_map, weight, bias_vec,
                                     truncate=False, shift=0.0, bias=True)
    assert pred.shape == (B, OC) and score_map.shape == (B, OC, H, W)
    assert jnp.allclose(pred, ref_pred, atol=1e-4, rtol=1e-4)
    assert jnp.allclose(score_map, ref_score, atol=1e-4, rtol=1e-4)

    # Case 2: non-128-aligned spatial (14x14 -> padded lanes), truncate path,
    # conv-style 4-D weight, no bias.
    H2 = W2 = 14
    fm2 = jax.random.normal(k_x, (B, C, H2, W2), dtype=jnp.float32)
    w4 = weight.reshape(OC, C, 1, 1)
    pred2, score2 = custom_avgpool2d(fm2, w4, None, truncate=True, shift=0.0, bias=False)
    jax.block_until_ready((pred2, score2))
    ref_pred2, ref_score2 = _reference(fm2, w4, None, truncate=True, shift=0.0, bias=False)
    assert pred2.shape == (B, OC) and score2.shape == (B, OC, H2, W2)
    assert jnp.allclose(pred2, ref_pred2, atol=1e-4, rtol=1e-4)
    assert jnp.allclose(score2, ref_score2, atol=1e-4, rtol=1e-4)

    # Case 3: bf16 feature map (native bf16 MXU feed, bf16 score writeback, f32 pred).
    fm3 = feature_map.astype(jnp.bfloat16)
    pred3, score3 = custom_avgpool2d(fm3, weight, bias_vec,
                                     truncate=False, shift=0.0, bias=True)
    jax.block_until_ready((pred3, score3))
    ref_pred3, ref_score3 = _reference(fm3, weight, bias_vec,
                                       truncate=False, shift=0.0, bias=True)
    assert score3.dtype == jnp.bfloat16
    assert jnp.allclose(pred3, ref_pred3, atol=1e-3, rtol=5e-2)
    assert jnp.allclose(score3.astype(jnp.float32), ref_score3, atol=1e-3, rtol=5e-2)

    print("KERNEL_OK")
</pallas_src>

<mosaic_0001>
module attributes {stable_mosaic.version = 11 : i64} {
  func.func @_custom_avgpool_kernel(%arg0: i32, %arg1: i32, %arg2: memref<8x4xf32, #tpu.memory_space<vmem>>, %arg3: memref<1x4x256xf32, #tpu.memory_space<vmem>>, %arg4: memref<1x1x8xf32, #tpu.memory_space<vmem>>, %arg5: memref<1x8x256xf32, #tpu.memory_space<vmem>>) attributes {dimension_semantics = [#tpu.dimension_semantics<parallel>, #tpu.dimension_semantics<parallel>], iteration_bounds = array<i64: 2, 1>, scalar_prefetch = 0 : i64, scratch_operands = 0 : i64, tpu.core_type = #tpu.core_type<tc>, window_params = [{pipeline_mode = #tpu.pipeline_mode<synchronous>, transform_indices = @transform_0, window_bounds = array<i64: 8, 4>}, {transform_indices = @transform_1, window_bounds = array<i64: 1, 4, 256>}, {transform_indices = @transform_2, window_bounds = array<i64: 1, 1, 8>}, {transform_indices = @transform_3, window_bounds = array<i64: 1, 8, 256>}]} {
    %c0 = arith.constant 0 : index
    %c0_0 = arith.constant 0 : index
    %0 = vector.load %arg2[%c0, %c0_0] : memref<8x4xf32, #tpu.memory_space<vmem>>, vector<8x4xf32>
    %c0_1 = arith.constant 0 : index
    %c0_2 = arith.constant 0 : index
    %c0_3 = arith.constant 0 : index
    %1 = vector.load %arg3[%c0_1, %c0_2, %c0_3] : memref<1x4x256xf32, #tpu.memory_space<vmem>>, vector<1x4x256xf32>
    %2 = vector.shape_cast %1 : vector<1x4x256xf32> to vector<4x256xf32>
    %cst = arith.constant dense<0.000000e+00> : vector<8x256xf32>
    %3 = tpu.matmul %0, %2, %cst {dimension_numbers = #tpu.dot_dimension_numbers<[1], [0], [0], [1], [0, 0, 1, 1], [], []>} : vector<8x4xf32>, vector<4x256xf32>, vector<8x256xf32> -> vector<8x256xf32>
    %c0_4 = arith.constant 0 : index
    %c0_5 = arith.constant 0 : index
    %c0_6 = arith.constant 0 : index
    %4 = vector.load %arg5[%c0_4, %c0_5, %c0_6] : memref<1x8x256xf32, #tpu.memory_space<vmem>>, vector<1x8x256xf32>
    %5 = vector.shape_cast %4 : vector<1x8x256xf32> to vector<8x256xf32>
    %6 = vector.shape_cast %3 : vector<8x256xf32> to vector<1x8x256xf32>
    tpu.vector_store %arg5[%c0_4, %c0_5, %c0_6], %6 {strides = array<i32>} : memref<1x8x256xf32, #tpu.memory_space<vmem>>, vector<1x8x256xf32>,
    %cst_7 = arith.constant dense<0.000000e+00> : vector<8xf32>
    %7 = vector.multi_reduction <add>, %3, %cst_7 [1] : vector<8x256xf32> to vector<8xf32>
    %8 = vector.shape_cast %7 : vector<8xf32> to vector<1x1x8xf32>
    %c0_8 = arith.constant 0 : index
    %c0_9 = arith.constant 0 : index
    %c0_10 = arith.constant 0 : index
    %9 = vector.load %arg4[%c0_8, %c0_9, %c0_10] : memref<1x1x8xf32, #tpu.memory_space<vmem>>, vector<1x1x8xf32>
    tpu.vector_store %arg4[%c0_8, %c0_9, %c0_10], %8 {strides = array<i32>} : memref<1x1x8xf32, #tpu.memory_space<vmem>>, vector<1x1x8xf32>,
    return
  }
  func.func @transform_0(%arg0: i32, %arg1: i32) -> (i32, i32) {
    %c0_i32 = arith.constant 0 : i32
    %c0_i32_0 = arith.constant 0 : i32
    %c0_i32_1 = arith.constant 0 : i32
    return %c0_i32, %c0_i32_0 : i32, i32
  }
  func.func @transform_1(%arg0: i32, %arg1: i32) -> (i32, i32, i32) {
    %c0_i32 = arith.constant 0 : i32
    %c0_i32_0 = arith.constant 0 : i32
    return %arg0, %c0_i32, %arg1 : i32, i32, i32
  }
  func.func @transform_2(%arg0: i32, %arg1: i32) -> (i32, i32, i32) {
    %c0_i32 = arith.constant 0 : i32
    %c0_i32_0 = arith.constant 0 : i32
    return %arg0, %arg1, %c0_i32 : i32, i32, i32
  }
  func.func @transform_3(%arg0: i32, %arg1: i32) -> (i32, i32, i32) {
    %c0_i32 = arith.constant 0 : i32
    %c0_i32_0 = arith.constant 0 : i32
    return %arg0, %c0_i32, %arg1 : i32, i32, i32
  }
}

</mosaic_0001>

<llo_original>
// kernel: tpu_custom_call.1
$region0: #{tpu_custom_call.1}
  #allocation0 [shape = 'u32[]', space=smem, size = 0x4, offset = 0x4, fixed_abs, tag = 'smem constant byte address 0x4 - core index']
  #allocation1 [shape = 'u32[72,128]{1,0:T(1,128)}', space=vmem, size = 0x9000, scoped, tag = 'internal scratch']
  %s0 = inlined_call_operand.vmem [shape: f32[8,4], index: 0, kind: input, shape index: {}]
  %s1 = inlined_call_operand.hbm [shape: f32[2,4,256], index: 1, kind: input, shape index: {}]
  %s2 = inlined_call_operand.hbm [shape: f32[2,1,8], index: 2, kind: output, shape index: {0}]
  %s3 = inlined_call_operand.hbm [shape: f32[2,8,256], index: 3, kind: output, shape index: {1}]
  %4 = xla_tuple %s2, %s3
  %s5 = sld [smem:[#allocation0]]
  $region53: #{tpu_custom_call.1} parent=0
    _
  %s7 = ssub.s32 1, %s5
  %s8 = scalar_select 0, %s7, %s5
  $region1: #{tpu_custom_call.1} parent=0
    #allocation2 [shape = 'u8[8192]{0}', space=vmem, size = 0x2000, scoped, tag = 'input window, operand 1']
    #allocation3 [shape = 's32[2]{0}', space=sflag, size = 0x8, scoped, tag = 'scoped memory for tpu_custom_call.1']
    #allocation4 [shape = 's32[2]{0}', space=sflag, size = 0x8, scoped, tag = 'scoped memory for tpu_custom_call.1']
    #allocation5 [shape = 'u8[1024]{0}', space=vmem, size = 0x400, scoped, tag = 'output window, operand 0']
    #allocation6 [shape = 'u8[16384]{0}', space=vmem, size = 0x4000, scoped, tag = 'output window, operand 1']
    #allocation7 [shape = 's32[2]{0}', space=sflag, size = 0x8, scoped, tag = 'scoped memory for tpu_custom_call.1']
    %9 = vsyncpa [#allocation3], 0
    %s10 = scalar_lea.sflag [#allocation3], 1
    %11 = vsyncpa %s10, 0
    %12 = vsyncpa [#allocation4], 0
    %s13 = scalar_lea.sflag [#allocation4], 1
    %14 = vsyncpa %s13, 0
    %15 = vsyncpa [#allocation7], 0
    %s16 = scalar_lea.sflag [#allocation7], 1
    %17 = vsyncpa %s16, 0
    loop: start=0, step=1, limit=4
    $region2: #{tpu_custom_call.1} parent=1 // loop_pre_header
      _
    $region3: #{tpu_custom_call.1} parent=1 // loop_header
      %s19 = sphi 0, %s23
      %p20 = scmp.ge.s32.totalorder %s19, 4
      %s26 = sphi 0, %s38
      %s27 = sphi 0, %s34
      %s28 = sphi 0, %s26
      %s29 = sphi 0, %s27
      %s30 = sphi 0, %s28
      %s31 = sphi 0, %s29
      %s39 = sphi 0, %s39
      %s41 = sphi 0, %s39
      %s42 = sphi 0, %s41
      %s56 = sphi 0, %s42
      %s64 = sphi 0, %s66
      %s67 = sphi 0, %s64
      %s68 = sphi 0, %s67
      %s84 = sphi 0, %s68
      %s92 = sphi 0, %s94
      %s95 = sphi 0, %s92
      %s96 = sphi 0, %s95
      %s112 = sphi 0, %s96
      %s120 = sphi 0, %s122
      %s123 = sphi 0, %s120
      %s124 = sphi 0, %s123
      %s140 = sphi 0, %s124
    $region4: #{tpu_custom_call.1} parent=1 // loop_header_branch
      %22 = sbr.rel (%p20) target = $region8
    $region5: #{tpu_custom_call.1} parent=1 // loop_body
      %s24 = ssub.s32 %s19, 1
      %s25 = ssub.s32 %s19, 2
      %s32 = sadd.s32 1, %s27
      %p33 = scmp.ge.s32.totalorder %s32, 1
      %s34 = scalar_select %p33, 0, %s32
      %s35 = sadd.s32 1, %s26
      %s36 = scalar_select %p33, %s35, %s26
      %p37 = scmp.ge.s32.totalorder %s36, 2
      %s38 = scalar_select %p37, 0, %s36
      %s40 = sadd.s32 %s39, 1
      %p43 = scmp.eq.s32.totalorder %s19, 1
      %p44 = scmp.ne.s32.totalorder %s39, %s41
      %p45 = scmp.eq.s32.totalorder %s19, 0
      %p46 = por %p44, %p45
      %p47 = scmp.ne.s32.totalorder %s39, %s41
      %p48 = scmp.eq.s32.totalorder %s24, 1
      %p49 = por %p47, %p48
      %p50 = scmp.ne.s32.totalorder %s41, %s42
      %p51 = scmp.eq.s32.totalorder %s24, 0
      %p52 = por %p50, %p51
      %p53 = scmp.ne.s32.totalorder %s41, %s42
      %p54 = scmp.eq.s32.totalorder %s25, 1
      %p55 = por %p53, %p54
      %p57 = scmp.ne.s32.totalorder %s42, %s56
      %p58 = scmp.eq.s32.totalorder %s25, 0
      %p59 = por %p57, %p58
      %s60 = ssub.s32 %s26, %s38
      %s61 = ssub.s32 %s27, %s34
      %s62 = sor.u32 %s60, %s61
      %p63 = scmp.eq.s32.totalorder %s62, 0
      %s65 = sadd.s32 %s64, 1
      %s66 = scalar_select %p63, %s64, %s65
      %p69 = pneg %p63
      %p70 = scmp.eq.s32.totalorder %s19, 1
      %p71 = por %p69, %p70
      %p72 = scmp.ne.s32.totalorder %s64, %s67
      %p73 = scmp.eq.s32.totalorder %s19, 0
      %p74 = por %p72, %p73
      %p75 = scmp.ne.s32.totalorder %s64, %s67
      %p76 = scmp.eq.s32.totalorder %s24, 1
      %p77 = por %p75, %p76
      %p78 = scmp.ne.s32.totalorder %s67, %s68
      %p79 = scmp.eq.s32.totalorder %s24, 0
      %p80 = por %p78, %p79
      %p81 = scmp.ne.s32.totalorder %s67, %s68
      %p82 = scmp.eq.s32.totalorder %s25, 1
      %p83 = por %p81, %p82
      %p85 = scmp.ne.s32.totalorder %s68, %s84
      %p86 = scmp.eq.s32.totalorder %s25, 0
      %p87 = por %p85, %p86
      %s88 = ssub.s32 %s26, %s38
      %s89 = ssub.s32 %s27, %s34
      %s90 = sor.u32 %s88, %s89
      %p91 = scmp.eq.s32.totalorder %s90, 0
      %s93 = sadd.s32 %s92, 1
      %s94 = scalar_select %p91, %s92, %s93
      %p97 = pneg %p91
      %p98 = scmp.eq.s32.totalorder %s19, 1
      %p99 = por %p97, %p98
      %p100 = scmp.ne.s32.totalorder %s92, %s95
      %p101 = scmp.eq.s32.totalorder %s19, 0
      %p102 = por %p100, %p101
      %p103 = scmp.ne.s32.totalorder %s92, %s95
      %p104 = scmp.eq.s32.totalorder %s24, 1
      %p105 = por %p103, %p104
      %p106 = scmp.ne.s32.totalorder %s95, %s96
      %p107 = scmp.eq.s32.totalorder %s24, 0
      %p108 = por %p106, %p107
      %p109 = scmp.ne.s32.totalorder %s95, %s96
      %p110 = scmp.eq.s32.totalorder %s25, 1
      %p111 = por %p109, %p110
      %p113 = scmp.ne.s32.totalorder %s96, %s112
      %p114 = scmp.eq.s32.totalorder %s25, 0
      %p115 = por %p113, %p114
      %s116 = ssub.s32 %s26, %s38
      %s117 = ssub.s32 %s27, %s34
      %s118 = sor.u32 %s116, %s117
      %p119 = scmp.eq.s32.totalorder %s118, 0
      %s121 = sadd.s32 %s120, 1
      %s122 = scalar_select %p119, %s120, %s121
      %p125 = pneg %p119
      %p126 = scmp.eq.s32.totalorder %s19, 1
      %p127 = por %p125, %p126
      %p128 = scmp.ne.s32.totalorder %s120, %s123
      %p129 = scmp.eq.s32.totalorder %s19, 0
      %p130 = por %p128, %p129
      %p131 = scmp.ne.s32.totalorder %s120, %s123
      %p132 = scmp.eq.s32.totalorder %s24, 1
      %p133 = por %p131, %p132
      %p134 = scmp.ne.s32.totalorder %s123, %s124
      %p135 = scmp.eq.s32.totalorder %s24, 0
      %p136 = por %p134, %p135
      %p137 = scmp.ne.s32.totalorder %s123, %s124
      %p138 = scmp.eq.s32.totalorder %s25, 1
      %p139 = por %p137, %p138
      %p141 = scmp.ne.s32.totalorder %s124, %s140
      %p142 = scmp.eq.s32.totalorder %s25, 0
      %p143 = por %p141, %p142
      %p144 = scmp.le.s32.totalorder 1, %s19
      %p145 = scmp.lt.s32.totalorder %s19, 3
      %p146 = pnand %p144, %p145
      %p147 = pneg %p146
      // Predicated region
      $region9: #{tpu_custom_call.1} parent=5 // pred_check
        _
      $region10: #{tpu_custom_call.1} parent=5 // pred_check_branch
        %149 = sbr.rel (%p146) target = $region12
      $region11: #{tpu_custom_call.1} parent=5 // pred_region
        %s150 = ssub.s32 %s19, 1
        // Predicated region
        $region13: #{tpu_custom_call.1} parent=11 // pred_check
          %p151 = pneg %p52
        $region14: #{tpu_custom_call.1} parent=11 // pred_check_branch
          %153 = sbr.rel (%p151) target = $region16
        $region15: #{tpu_custom_call.1} parent=11 // pred_region
          _
        $region16: #{tpu_custom_call.1} parent=11 // pred_fallthru
          _
      $region12: #{tpu_custom_call.1} parent=5 // pred_fallthru
        _
      %p154 = scmp.lt.s32.totalorder %s19, 2
      // Predicated region
      $region17: #{tpu_custom_call.1} parent=5 // pred_check
        %p155 = pneg %p154
      $region18: #{tpu_custom_call.1} parent=5 // pred_check_branch
        %157 = sbr.rel (%p155) target = $region20
      $region19: #{tpu_custom_call.1} parent=5 // pred_region
        // Predicated region
        $region21: #{tpu_custom_call.1} parent=19 // pred_check
          %p158 = pneg %p74
        $region22: #{tpu_custom_call.1} parent=19 // pred_check_branch
          %160 = sbr.rel (%p158) target = $region24
        $region23: #{tpu_custom_call.1} parent=19 // pred_region
          %s161 = sand.u32 %s64, 1
          %s162 = scalar_lea.sflag [#allocation3], %s161
          %s163 = sand.u32 %s64, 1
          %s164 = smul.addr %s163, 8
          %s165 = scalar_lea.vmem [#allocation2], %s164
          %s166 = smul.u32 2, %s27
          %168 = vsyncadd %s162, 0
          %s169 = smul.addr %s26, 2
          %s170 = sadd.s32 %s166, %s169
          %s171 = smul.addr %s170, 4
          %s172 = scalar_lea.hbm %s1, %s171
          %s174 = sshll.u32 %s172, 4
          %s175 = int_to_ptr.hbm [resolvable:$true] %s174
          %s176 = sshll.u32 %s165, 4
          %s177 = int_to_ptr.vmem [resolvable:$true] %s176
          %179 = dma.hbm_to_vmem [thread:$0]  %s175, 128, %s177, %s162
        $region24: #{tpu_custom_call.1} parent=19 // pred_fallthru
          _
      $region20: #{tpu_custom_call.1} parent=5 // pred_fallthru
        _
      %p180 = scmp.le.s32.totalorder 1, %s19
      %p181 = scmp.lt.s32.totalorder %s19, 3
      %p182 = pnand %p180, %p181
      %p183 = pneg %p182
      // Predicated region
      $region25: #{tpu_custom_call.1} parent=5 // pred_check
        _
      $region26: #{tpu_custom_call.1} parent=5 // pred_check_branch
        %185 = sbr.rel (%p182) target = $region28
      $region27: #{tpu_custom_call.1} parent=5 // pred_region
        %s186 = ssub.s32 %s19, 1
        %s187 = sand.u32 %s67, 1
        %s188 = scalar_lea.sflag [#allocation3], %s187
        %s189 = sand.u32 %s67, 1
        %s190 = smul.addr %s189, 8
        %s191 = scalar_lea.vmem [#allocation2], %s190
        // Predicated region
        $region29: #{tpu_custom_call.1} parent=27 // pred_check
          %p192 = pneg %p80
        $region30: #{tpu_custom_call.1} parent=27 // pred_check_branch
          %194 = sbr.rel (%p192) target = $region32
        $region31: #{tpu_custom_call.1} parent=27 // pred_region
          %196 = dma.done %s188, 128
        $region32: #{tpu_custom_call.1} parent=27 // pred_fallthru
          _
        %p197 = pneg %p52
        %p198 = pneg %p49
        %s199 = sand.u32 %s67, 1
        %s200 = scalar_lea.sflag [#allocation3], %s199
        %s201 = sand.u32 %s67, 1
        %s202 = smul.addr %s201, 8
        %s203 = scalar_lea.vmem [#allocation2], %s202
        %p204 = pneg %p80
        %p205 = pneg %p77
        %p206 = pneg %p108
        %p207 = pneg %p105
        %s208 = sand.u32 %s95, 1
        %s209 = scalar_lea.sflag [#allocation4], %s208
        %s210 = sand.u32 %s95, 1
        %s211 = scalar_lea.vmem [#allocation5], %s210
        %p212 = pneg %p136
        %p213 = pneg %p133
        %s214 = sand.u32 %s123, 1
        %s215 = scalar_lea.sflag [#allocation7], %s214
        %s216 = sand.u32 %s123, 1
        %s217 = smul.addr %s216, 16
        %s218 = scalar_lea.vmem [#allocation6], %s217
        %s219 = smul.u32 2, %s29
        %s220 = smul.u32 2, %s29
        %v221 = vld [vmem:[%s0] sm:$0xff]
        %v222 = vld [vmem:[%s191] sm:$0xff]
        %224 = vst [vmem:[#allocation1] ss:$2 sm:$0xff] %v222
        %v225 = vld.sshfl [vmem:[#allocation1] sm:$0xff pattern:$0x75316420]
        %v226 = vld.sshfl [vmem:[#allocation1 + $0x8] sm:$0xff pattern:$0x75316420]
        %vm227 = vcmask 31744
        %v229 = vsel %vm227, %v221, 0
        %vm231 = vcmask 1043456
        %v232 = vsel %vm231, %v225, 0
        %v234 = vsel %vm231, %v226, 0
        %236 = vmatpush.msra.mxu0 0.0
        %237 = vmatpush.msra.mxu0 0.0
        %238 = vmatpush.msra.mxu0 0.0
        %239 = vmatpush.msra.mxu0 0.0
        %240 = vmatpush.msra.mxu0 0.0
        %241 = vmatpush.msra.mxu0 0.0
        %242 = vmatpush.msra.mxu0 0.0
        %243 = vmatpush.msra.mxu0 0.0
        %244 = vmatpush.msra.mxu0 0.0
        %245 = vmatpush.msra.mxu0 0.0
        %246 = vmatpush.msra.mxu0 0.0
        %247 = vmatpush.msra.mxu0 0.0
        %248 = vmatpush.msra.mxu0 0.0
        %249 = vmatpush.msra.mxu0 0.0
        %250 = vmatpush.msra.mxu0 0.0
        %251 = vmatpush.msra.mxu0 %v232
        %252 = vmatmul.f32.gmra.mxu0 %v229
        %v253 = vpop.f32.mrf.mxu0
        %v254 = vadd.f32 0.0, %v253
        %255 = vdwg.mxu0
        %256 = vmatpush.msra.mxu0 0.0
        %257 = vmatpush.msra.mxu0 0.0
        %258 = vmatpush.msra.mxu0 0.0
        %259 = vmatpush.msra.mxu0 0.0
        %260 = vmatpush.msra.mxu0 0.0
        %261 = vmatpush.msra.mxu0 0.0
        %262 = vmatpush.msra.mxu0 0.0
        %263 = vmatpush.msra.mxu0 0.0
        %264 = vmatpush.msra.mxu0 0.0
        %265 = vmatpush.msra.mxu0 0.0
        %266 = vmatpush.msra.mxu0 0.0
        %267 = vmatpush.msra.mxu0 0.0
        %268 = vmatpush.msra.mxu0 0.0
        %269 = vmatpush.msra.mxu0 0.0
        %270 = vmatpush.msra.mxu0 0.0
        %271 = vmatpush.msra.mxu0 %v234
        %272 = vmatmul.f32.gmra.mxu0 %v229
        %v273 = vpop.f32.mrf.mxu0
        %v274 = vadd.f32 0.0, %v273
        %275 = vdwg.mxu0
        %276 = vst [vmem:[%s218] sm:$0xff] %v254
        %277 = vst [vmem:[%s218 + $0x8] sm:$0xff] %v274
        %v278 = vadd.f32 %v254, %v274
        %279 = vadd.xlane.f32.xlu0 %v278
        %v280 = vpop.xlane.xlu0 %279
        %v282 = vlaneseq
        %v283 = vand.u32 %v282, 127
        %v284 = vperm.slane %v280, %v283
        %vm286 = vcmask 57344
        %287 = vst.msk [vmem:[%s211] sm:$0x1] %vm286, %v284
        %s288 = sand.u32 %s95, 1
        %s289 = scalar_lea.sflag [#allocation4], %s288
        %s290 = sand.u32 %s95, 1
        %s291 = scalar_lea.vmem [#allocation5], %s290
        %s292 = sand.u32 %s123, 1
        %s293 = scalar_lea.sflag [#allocation7], %s292
        %s294 = sand.u32 %s123, 1
        %s295 = smul.addr %s294, 16
        %s296 = scalar_lea.vmem [#allocation6], %s295
        // Predicated region
        $region33: #{tpu_custom_call.1} parent=27 // pred_check
          %p297 = pneg %p105
        $region34: #{tpu_custom_call.1} parent=27 // pred_check_branch
          %299 = sbr.rel (%p297) target = $region36
        $region35: #{tpu_custom_call.1} parent=27 // pred_region
          %301 = vsyncadd %s289, 0
          %s302 = sadd.s32 %s29, %s28
          %s303 = scalar_lea.hbm %s2, %s302
          %s305 = sshll.u32 %s291, 4
          %s306 = int_to_ptr.vmem [resolvable:$true] %s305
          %s307 = sshll.u32 %s303, 4
          %s308 = int_to_ptr.hbm [resolvable:$true] %s307
          %310 = dma.vmem_to_hbm [thread:$0]  %s306, 16, %s308, %s289
        $region36: #{tpu_custom_call.1} parent=27 // pred_fallthru
          _
        // Predicated region
        $region37: #{tpu_custom_call.1} parent=27 // pred_check
          %p311 = pneg %p133
        $region38: #{tpu_custom_call.1} parent=27 // pred_check_branch
          %313 = sbr.rel (%p311) target = $region40
        $region39: #{tpu_custom_call.1} parent=27 // pred_region
          %s314 = smul.u32 2, %s29
          %316 = vsyncadd %s293, 0
          %s317 = smul.addr %s28, 2
          %s318 = sadd.s32 %s314, %s317
          %s319 = smul.addr %s318, 8
          %s320 = scalar_lea.hbm %s3, %s319
          %s322 = sshll.u32 %s296, 4
          %s323 = int_to_ptr.vmem [resolvable:$true] %s322
          %s324 = sshll.u32 %s320, 4
          %s325 = int_to_ptr.hbm [resolvable:$true] %s324
          %327 = dma.vmem_to_hbm [thread:$0]  %s323, 256, %s325, %s293
        $region40: #{tpu_custom_call.1} parent=27 // pred_fallthru
          _
      $region28: #{tpu_custom_call.1} parent=5 // pred_fallthru
        _
      %p328 = scmp.le.s32.totalorder 2, %s19
      // Predicated region
      $region41: #{tpu_custom_call.1} parent=5 // pred_check
        %p329 = pneg %p328
      $region42: #{tpu_custom_call.1} parent=5 // pred_check_branch
        %331 = sbr.rel (%p329) target = $region44
      $region43: #{tpu_custom_call.1} parent=5 // pred_region
        %s332 = ssub.s32 %s19, 2
        // Predicated region
        $region45: #{tpu_custom_call.1} parent=43 // pred_check
          %p333 = pneg %p111
        $region46: #{tpu_custom_call.1} parent=43 // pred_check_branch
          %335 = sbr.rel (%p333) target = $region48
        $region47: #{tpu_custom_call.1} parent=43 // pred_region
          %s336 = sand.u32 %s96, 1
          %s337 = scalar_lea.sflag [#allocation4], %s336
          %s338 = sand.u32 %s96, 1
          %s339 = scalar_lea.vmem [#allocation5], %s338
          %341 = dma.done %s337, 16
        $region48: #{tpu_custom_call.1} parent=43 // pred_fallthru
          _
        // Predicated region
        $region49: #{tpu_custom_call.1} parent=43 // pred_check
          %p342 = pneg %p139
        $region50: #{tpu_custom_call.1} parent=43 // pred_check_branch
          %344 = sbr.rel (%p342) target = $region52
        $region51: #{tpu_custom_call.1} parent=43 // pred_region
          %s345 = sand.u32 %s124, 1
          %s346 = scalar_lea.sflag [#allocation7], %s345
          %s347 = sand.u32 %s124, 1
          %s348 = smul.addr %s347, 16
          %s349 = scalar_lea.vmem [#allocation6], %s348
          %351 = dma.done %s346, 256
        $region52: #{tpu_custom_call.1} parent=43 // pred_fallthru
          _
      $region44: #{tpu_custom_call.1} parent=5 // pred_fallthru
        _
    $region6: #{tpu_custom_call.1} parent=1 // loop_footer
      %s23 = sadd.s32 1, %s19
    $region7: #{tpu_custom_call.1} parent=1 // loop_footer_branch
      %18 = sbr.rel target = $region3
    $region8: #{tpu_custom_call.1} parent=1 // loop_exit
      _
    %352 = vsyncpa [#allocation3], 1
    %s353 = scalar_lea.sflag [#allocation3], 1
    %354 = vsyncpa %s353, 1
    %355 = vsyncpa [#allocation4], 1
    %s356 = scalar_lea.sflag [#allocation4], 1
    %357 = vsyncpa %s356, 1
    %358 = vsyncpa [#allocation7], 1
    %s359 = scalar_lea.sflag [#allocation7], 1
    %360 = vsyncpa %s359, 1

</llo_original>
